<compile_context>
chip_gen: v7x
topology: tpu7x:2x2x1
jax: 0.10.0
libtpu: 0.0.40
codegen_flags: <defaults>
</compile_context>

<pallas_src>
import functools

import jax
import jax.numpy as jnp
from jax.experimental import pallas as pl
from jax.experimental.pallas import tpu as pltpu


def _round_up(x, m):
    return ((x + m - 1) // m) * m


def _mlp_kernel(*refs, n_linear, positive, sigmoid, use_bf16, small_k):
    """refs = (z_ref, w0, b0, w1, b1, ..., w_{L-1}, b_{L-1}, out_ref).

    The whole MLP (linears + tanh activations + optional softplus/sigmoid head)
    is fused into one kernel body; the Python loop unrolls at trace time.
    """
    z_ref = refs[0]
    out_ref = refs[-1]
    param_refs = refs[1:-1]

    h = z_ref[...]
    for i in range(n_linear):
        w = param_refs[2 * i][...]
        b = param_refs[2 * i + 1][...].astype(jnp.float32)
        in_dim = w.shape[0]
        if in_dim <= small_k:
            # Tiny contraction dim (e.g. n_trees=4): a K=4 matmul wastes the
            # 128/256-deep systolic array and pays MXU result-FIFO latency, so
            # do it as `in_dim` broadcast multiply-adds on the VPU instead and
            # keep the MXU free for the width x width layers.
            hf = h.astype(jnp.float32)
            wf = w.astype(jnp.float32)
            acc = jnp.broadcast_to(b, (hf.shape[0], wf.shape[1]))
            for k in range(in_dim):
                acc = acc + hf[:, k:k + 1] * wf[k:k + 1, :]
            h = acc
        else:
            # MXU path.  Weights are already bf16 if use_bf16 (cast once in the
            # wrapper); accumulate in f32 via preferred_element_type.
            lhs = h.astype(jnp.bfloat16) if use_bf16 else h.astype(jnp.float32)
            h = jnp.dot(lhs, w, preferred_element_type=jnp.float32) + b
        if i < n_linear - 1:
            h = jnp.tanh(h)  # EUP work; overlaps with MXU/VPU slots

    if positive:
        # Numerically stable softplus (identical to jax.nn.softplus / torch):
        # log1p(exp(-|x|)) + max(x, 0)
        h = jnp.log1p(jnp.exp(-jnp.abs(h))) + jnp.maximum(h, 0.0)
    elif sigmoid:
        h = 1.0 / (1.0 + jnp.exp(-h))

    out_ref[...] = h.astype(out_ref.dtype)


def net1_forward(Z, weights, biases, *, positive=False, sigmoid=False,
                 tile_b=1024, use_bf16=False):
    """Run the Net1 MLP forward pass as a single fused Pallas kernel.

    Z:        (B, n_trees) float32
    weights:  list of (in_dim, out_dim) float32 arrays (transposed vs torch)
    biases:   list of (1, out_dim) float32 arrays
    """
    B, n_trees = Z.shape
    n_linear = len(weights)

    # --- tile-size selection -------------------------------------------------
    # HBM traffic is only 32 B/row while each tile does ~2.5 KFLOP/row, so the
    # kernel is step-overhead / compute bound: use large batch tiles.  Clamp to
    # the (8-aligned) batch so small batches don't over-pad; pad B up to a
    # multiple of the tile so any batch size works (tail sliced off after).
    tb = max(8, min(_round_up(tile_b, 8), _round_up(B, 8)))
    B_pad = _round_up(B, tb)
    Zp = Z if B_pad == B else jnp.pad(Z, ((0, B_pad - B), (0, 0)))
    grid = (B_pad // tb,)

    # Cast weights once in the wrapper (not per grid step inside the kernel).
    if use_bf16:
        weights = [w.astype(jnp.bfloat16) for w in weights]

    # --- VMEM budget (deliberate, instead of relying on the scoped default) ---
    param_bytes = sum(int(w.size) * w.dtype.itemsize + int(b.size) * b.dtype.itemsize
                      for w, b in zip(weights, biases))
    max_width = max([n_trees] + [int(w.shape[1]) for w in weights])
    io_bytes = 2 * tb * n_trees * 4                 # one Z tile + one out tile
    act_bytes = 4 * tb * max_width * 4              # activation temporaries
    vmem_bytes = 2 * (param_bytes + io_bytes) + act_bytes   # x2: double-buffering
    # Floor at 32 MiB (compiler scratch headroom), stay under v7x's 64 MiB VMEM.
    vmem_bytes = int(min(max(vmem_bytes, 32 << 20), 48 << 20))

    kernel = functools.partial(
        _mlp_kernel, n_linear=n_linear, positive=positive, sigmoid=sigmoid,
        use_bf16=use_bf16, small_k=8,
    )

    # Z / output tiled over batch; parameters use a grid-invariant index_map so
    # they are DMA'd once and stay VMEM-resident across the batch loop.
    in_specs = [pl.BlockSpec((tb, n_trees), lambda i: (i, 0))]
    operands = [Zp]
    for w, b in zip(weights, biases):
        in_specs.append(pl.BlockSpec(w.shape, lambda i: (0, 0)))
        in_specs.append(pl.BlockSpec(b.shape, lambda i: (0, 0)))
        operands.append(w)
        operands.append(b)

    out_spec = pl.BlockSpec((tb, n_trees), lambda i: (i, 0))

    out = pl.pallas_call(
        kernel,
        out_shape=jax.ShapeDtypeStruct((B_pad, n_trees), Z.dtype),
        grid_spec=pltpu.PrefetchScalarGridSpec(
            num_scalar_prefetch=0,
            grid=grid,
            in_specs=in_specs,
            out_specs=out_spec,
        ),
        compiler_params=pltpu.CompilerParams(
            dimension_semantics=("parallel",),   # batch tiles shard across v7x TCs
            vmem_limit_bytes=vmem_bytes,
        ),
    )(*operands)

    return out[:B] if B_pad != B else out


def init_net1_params(key, n_trees, nn_width, nn_num_layers):
    """Deterministic init mimicking torch.nn.Linear default (U[-1/sqrt(fan_in), +]).

    Returns weights as (in, out) and biases as (1, out).
    Layer structure (matches Net1.__init__):
      Linear(n_trees, nn_width), Tanh,
      (nn_num_layers - 1) x [Linear(nn_width, nn_width), Tanh],
      Linear(nn_width, n_trees)
    """
    dims = [n_trees] + [nn_width] * nn_num_layers + [n_trees]
    weights, biases = [], []
    for i in range(len(dims) - 1):
        fan_in, fan_out = dims[i], dims[i + 1]
        key, kw, kb = jax.random.split(key, 3)
        bound = 1.0 / jnp.sqrt(fan_in)
        w = jax.random.uniform(kw, (fan_in, fan_out), jnp.float32, -bound, bound)
        b = jax.random.uniform(kb, (1, fan_out), jnp.float32, -bound, bound)
        weights.append(w)
        biases.append(b)
    return weights, biases


def net1_reference(Z, weights, biases, *, positive=False, sigmoid=False):
    """Plain-JAX reference of the same forward (for correctness check)."""
    h = Z
    n = len(weights)
    for i, (w, b) in enumerate(zip(weights, biases)):
        h = h @ w + b
        if i < n - 1:
            h = jnp.tanh(h)
    if positive:
        h = jax.nn.softplus(h)
    elif sigmoid:
        h = 1.0 / (1.0 + jnp.exp(-h))
    return h


if __name__ == "__main__":
    # Small shapes consistent with the module's params dict.
    params = {"n_trees": 4, "nn_width": 32, "nn_num_layers": 2}
    batch = 8

    key = jax.random.PRNGKey(0)
    key, kz = jax.random.split(key)
    Z = jax.random.normal(kz, (batch, params["n_trees"]), jnp.float32)

    weights, biases = init_net1_params(
        key, params["n_trees"], params["nn_width"], params["nn_num_layers"]
    )

    # 1) Default Net1(positive=False, sigmoid=False): no output activation.
    out = net1_forward(Z, weights, biases)
    out = jax.block_until_ready(out)
    ref = net1_reference(Z, weights, biases)
    assert out.shape == (batch, params["n_trees"])
    assert jnp.allclose(out, ref, atol=1e-5, rtol=1e-5), "mismatch (default head)"

    # 2) Softplus head (positive=True) and Sigmoid head.
    out_p = jax.block_until_ready(net1_forward(Z, weights, biases, positive=True))
    ref_p = net1_reference(Z, weights, biases, positive=True)
    assert jnp.allclose(out_p, ref_p, atol=1e-5, rtol=1e-5), "mismatch (softplus head)"

    out_s = jax.block_until_ready(net1_forward(Z, weights, biases, sigmoid=True))
    ref_s = net1_reference(Z, weights, biases, sigmoid=True)
    assert jnp.allclose(out_s, ref_s, atol=1e-5, rtol=1e-5), "mismatch (sigmoid head)"

    # 3) Batch not divisible by the tile: exercises pad + multi-step grid path.
    key, kz2 = jax.random.split(key)
    Z2 = jax.random.normal(kz2, (300, params["n_trees"]), jnp.float32)
    out2 = jax.block_until_ready(net1_forward(Z2, weights, biases, tile_b=128))
    ref2 = net1_reference(Z2, weights, biases)
    assert out2.shape == Z2.shape
    assert jnp.allclose(out2, ref2, atol=1e-5, rtol=1e-5), "mismatch (padded batch)"

    # 4) bf16 matmul inputs with f32 accumulation (looser tolerance).
    out_bf = jax.block_until_ready(net1_forward(Z, weights, biases, use_bf16=True))
    assert jnp.allclose(out_bf, ref, atol=5e-2, rtol=5e-2), "mismatch (bf16 path)"

    print("KERNEL_OK")
</pallas_src>

<mosaic_0001>
module attributes {stable_mosaic.version = 11 : i64} {
  func.func @_mlp_kernel(%arg0: i32, %arg1: memref<8x4xf32, #tpu.memory_space<vmem>>, %arg2: memref<4x32xf32, #tpu.memory_space<vmem>>, %arg3: memref<1x32xf32, #tpu.memory_space<vmem>>, %arg4: memref<32x32xf32, #tpu.memory_space<vmem>>, %arg5: memref<1x32xf32, #tpu.memory_space<vmem>>, %arg6: memref<32x4xf32, #tpu.memory_space<vmem>>, %arg7: memref<1x4xf32, #tpu.memory_space<vmem>>, %arg8: memref<8x4xf32, #tpu.memory_space<vmem>>) attributes {dimension_semantics = [#tpu.dimension_semantics<parallel>], iteration_bounds = array<i64: 1>, scalar_prefetch = 0 : i64, scratch_operands = 0 : i64, tpu.core_type = #tpu.core_type<tc>, window_params = [{transform_indices = @transform_0, window_bounds = array<i64: 8, 4>}, {pipeline_mode = #tpu.pipeline_mode<synchronous>, transform_indices = @transform_1, window_bounds = array<i64: 4, 32>}, {pipeline_mode = #tpu.pipeline_mode<synchronous>, transform_indices = @transform_2, window_bounds = array<i64: 1, 32>}, {pipeline_mode = #tpu.pipeline_mode<synchronous>, transform_indices = @transform_3, window_bounds = array<i64: 32, 32>}, {pipeline_mode = #tpu.pipeline_mode<synchronous>, transform_indices = @transform_4, window_bounds = array<i64: 1, 32>}, {pipeline_mode = #tpu.pipeline_mode<synchronous>, transform_indices = @transform_5, window_bounds = array<i64: 32, 4>}, {pipeline_mode = #tpu.pipeline_mode<synchronous>, transform_indices = @transform_6, window_bounds = array<i64: 1, 4>}, {transform_indices = @transform_7, window_bounds = array<i64: 8, 4>}]} {
    %c0 = arith.constant 0 : index
    %c0_0 = arith.constant 0 : index
    %0 = vector.load %arg1[%c0, %c0_0] : memref<8x4xf32, #tpu.memory_space<vmem>>, vector<8x4xf32>
    %c0_1 = arith.constant 0 : index
    %c0_2 = arith.constant 0 : index
    %1 = vector.load %arg2[%c0_1, %c0_2] : memref<4x32xf32, #tpu.memory_space<vmem>>, vector<4x32xf32>
    %c0_3 = arith.constant 0 : index
    %c0_4 = arith.constant 0 : index
    %2 = vector.load %arg3[%c0_3, %c0_4] : memref<1x32xf32, #tpu.memory_space<vmem>>, vector<1x32xf32>
    %3 = vector.shape_cast %2 : vector<1x32xf32> to vector<1x32xf32>
    %4 = vector.broadcast %3 : vector<1x32xf32> to vector<8x32xf32>
    %5 = vector.extract_strided_slice %0 {offsets = [0, 0], sizes = [8, 1], strides = [1, 1]} : vector<8x4xf32> to vector<8x1xf32>
    %6 = vector.extract_strided_slice %1 {offsets = [0, 0], sizes = [1, 32], strides = [1, 1]} : vector<4x32xf32> to vector<1x32xf32>
    %7 = vector.broadcast %5 : vector<8x1xf32> to vector<8x32xf32>
    %8 = vector.broadcast %6 : vector<1x32xf32> to vector<8x32xf32>
    %9 = arith.mulf %7, %8 : vector<8x32xf32>
    %10 = arith.addf %4, %9 : vector<8x32xf32>
    %11 = vector.extract_strided_slice %0 {offsets = [0, 1], sizes = [8, 1], strides = [1, 1]} : vector<8x4xf32> to vector<8x1xf32>
    %12 = vector.extract_strided_slice %1 {offsets = [1, 0], sizes = [1, 32], strides = [1, 1]} : vector<4x32xf32> to vector<1x32xf32>
    %13 = vector.broadcast %11 : vector<8x1xf32> to vector<8x32xf32>
    %14 = vector.broadcast %12 : vector<1x32xf32> to vector<8x32xf32>
    %15 = arith.mulf %13, %14 : vector<8x32xf32>
    %16 = arith.addf %10, %15 : vector<8x32xf32>
    %17 = vector.extract_strided_slice %0 {offsets = [0, 2], sizes = [8, 1], strides = [1, 1]} : vector<8x4xf32> to vector<8x1xf32>
    %18 = vector.extract_strided_slice %1 {offsets = [2, 0], sizes = [1, 32], strides = [1, 1]} : vector<4x32xf32> to vector<1x32xf32>
    %19 = vector.broadcast %17 : vector<8x1xf32> to vector<8x32xf32>
    %20 = vector.broadcast %18 : vector<1x32xf32> to vector<8x32xf32>
    %21 = arith.mulf %19, %20 : vector<8x32xf32>
    %22 = arith.addf %16, %21 : vector<8x32xf32>
    %23 = vector.extract_strided_slice %0 {offsets = [0, 3], sizes = [8, 1], strides = [1, 1]} : vector<8x4xf32> to vector<8x1xf32>
    %24 = vector.extract_strided_slice %1 {offsets = [3, 0], sizes = [1, 32], strides = [1, 1]} : vector<4x32xf32> to vector<1x32xf32>
    %25 = vector.broadcast %23 : vector<8x1xf32> to vector<8x32xf32>
    %26 = vector.broadcast %24 : vector<1x32xf32> to vector<8x32xf32>
    %27 = arith.mulf %25, %26 : vector<8x32xf32>
    %28 = arith.addf %22, %27 : vector<8x32xf32>
    %29 = math.tanh %28 : vector<8x32xf32>
    %c0_5 = arith.constant 0 : index
    %c0_6 = arith.constant 0 : index
    %30 = vector.load %arg4[%c0_5, %c0_6] : memref<32x32xf32, #tpu.memory_space<vmem>>, vector<32x32xf32>
    %c0_7 = arith.constant 0 : index
    %c0_8 = arith.constant 0 : index
    %31 = vector.load %arg5[%c0_7, %c0_8] : memref<1x32xf32, #tpu.memory_space<vmem>>, vector<1x32xf32>
    %cst = arith.constant dense<0.000000e+00> : vector<8x32xf32>
    %32 = tpu.matmul %29, %30, %cst {dimension_numbers = #tpu.dot_dimension_numbers<[1], [0], [0], [1], [0, 0, 1, 1], [], []>} : vector<8x32xf32>, vector<32x32xf32>, vector<8x32xf32> -> vector<8x32xf32>
    %33 = vector.broadcast %31 : vector<1x32xf32> to vector<8x32xf32>
    %34 = arith.addf %32, %33 : vector<8x32xf32>
    %35 = math.tanh %34 : vector<8x32xf32>
    %c0_9 = arith.constant 0 : index
    %c0_10 = arith.constant 0 : index
    %36 = vector.load %arg6[%c0_9, %c0_10] : memref<32x4xf32, #tpu.memory_space<vmem>>, vector<32x4xf32>
    %c0_11 = arith.constant 0 : index
    %c0_12 = arith.constant 0 : index
    %37 = vector.load %arg7[%c0_11, %c0_12] : memref<1x4xf32, #tpu.memory_space<vmem>>, vector<1x4xf32>
    %cst_13 = arith.constant dense<0.000000e+00> : vector<8x4xf32>
    %38 = tpu.matmul %35, %36, %cst_13 {dimension_numbers = #tpu.dot_dimension_numbers<[1], [0], [0], [1], [0, 0, 1, 1], [], []>} : vector<8x32xf32>, vector<32x4xf32>, vector<8x4xf32> -> vector<8x4xf32>
    %39 = vector.broadcast %37 : vector<1x4xf32> to vector<8x4xf32>
    %40 = arith.addf %38, %39 : vector<8x4xf32>
    %c0_14 = arith.constant 0 : index
    %c0_15 = arith.constant 0 : index
    %41 = vector.load %arg8[%c0_14, %c0_15] : memref<8x4xf32, #tpu.memory_space<vmem>>, vector<8x4xf32>
    tpu.vector_store %arg8[%c0_14, %c0_15], %40 {strides = array<i32>} : memref<8x4xf32, #tpu.memory_space<vmem>>, vector<8x4xf32>,
    return
  }
  func.func @transform_0(%arg0: i32) -> (i32, i32) {
    %c0_i32 = arith.constant 0 : i32
    %c0_i32_0 = arith.constant 0 : i32
    return %arg0, %c0_i32 : i32, i32
  }
  func.func @transform_1(%arg0: i32) -> (i32, i32) {
    %c0_i32 = arith.constant 0 : i32
    %c0_i32_0 = arith.constant 0 : i32
    %c0_i32_1 = arith.constant 0 : i32
    return %c0_i32, %c0_i32_0 : i32, i32
  }
  func.func @transform_2(%arg0: i32) -> (i32, i32) {
    %c0_i32 = arith.constant 0 : i32
    %c0_i32_0 = arith.constant 0 : i32
    %c0_i32_1 = arith.constant 0 : i32
    return %c0_i32, %c0_i32_0 : i32, i32
  }
  func.func @transform_3(%arg0: i32) -> (i32, i32) {
    %c0_i32 = arith.constant 0 : i32
    %c0_i32_0 = arith.constant 0 : i32
    %c0_i32_1 = arith.constant 0 : i32
    return %c0_i32, %c0_i32_0 : i32, i32
  }
  func.func @transform_4(%arg0: i32) -> (i32, i32) {
    %c0_i32 = arith.constant 0 : i32
    %c0_i32_0 = arith.constant 0 : i32
    %c0_i32_1 = arith.constant 0 : i32
    return %c0_i32, %c0_i32_0 : i32, i32
  }
  func.func @transform_5(%arg0: i32) -> (i32, i32) {
    %c0_i32 = arith.constant 0 : i32
    %c0_i32_0 = arith.constant 0 : i32
    %c0_i32_1 = arith.constant 0 : i32
    return %c0_i32, %c0_i32_0 : i32, i32
  }
  func.func @transform_6(%arg0: i32) -> (i32, i32) {
    %c0_i32 = arith.constant 0 : i32
    %c0_i32_0 = arith.constant 0 : i32
    %c0_i32_1 = arith.constant 0 : i32
    return %c0_i32, %c0_i32_0 : i32, i32
  }
  func.func @transform_7(%arg0: i32) -> (i32, i32) {
    %c0_i32 = arith.constant 0 : i32
    %c0_i32_0 = arith.constant 0 : i32
    return %arg0, %c0_i32 : i32, i32
  }
}

</mosaic_0001>

<llo_original>
// kernel: tpu_custom_call.1
$region0: #{tpu_custom_call.1}
  #allocation0 [shape = 'u32[]', space=smem, size = 0x4, offset = 0x4, fixed_abs, tag = 'smem constant byte address 0x4 - core index']
  #allocation1 [shape = 'u32[144,128]{1,0:T(1,128)}', space=vmem, size = 0x12000, scoped, tag = 'internal scratch']
  %s0 = inlined_call_operand.vmem [shape: f32[8,4], index: 0, kind: input, shape index: {}]
  %s1 = inlined_call_operand.vmem [shape: f32[4,32], index: 1, kind: input, shape index: {}]
  %s2 = inlined_call_operand.vmem [shape: f32[1,32], index: 2, kind: input, shape index: {}]
  %s3 = inlined_call_operand.vmem [shape: f32[32,32], index: 3, kind: input, shape index: {}]
  %s4 = inlined_call_operand.vmem [shape: f32[1,32], index: 4, kind: input, shape index: {}]
  %s5 = inlined_call_operand.vmem [shape: f32[32,4], index: 5, kind: input, shape index: {}]
  %s6 = inlined_call_operand.vmem [shape: f32[1,4], index: 6, kind: input, shape index: {}]
  %s7 = inlined_call_operand.vmem [shape: f32[8,4], index: 7, kind: output, shape index: {}]
  %s8 = sld [smem:[#allocation0]]
  $region38: #{tpu_custom_call.1} parent=0
    _
  %s10 = ssub.s32 1, %s8
  %s11 = scalar_select 0, %s10, %s8
  // Predicated region
  $region2: #{tpu_custom_call.1} parent=0 // pred_check
    _
  $region3: #{tpu_custom_call.1} parent=0 // pred_check_branch
    %13 = sbr.rel (0) target = $region5
  $region4: #{tpu_custom_call.1} parent=0 // pred_region
    _
  $region5: #{tpu_custom_call.1} parent=0 // pred_fallthru
    _
  // Predicated region
  $region6: #{tpu_custom_call.1} parent=0 // pred_check
    _
  $region7: #{tpu_custom_call.1} parent=0 // pred_check_branch
    %15 = sbr.rel (0) target = $region9
  $region8: #{tpu_custom_call.1} parent=0 // pred_region
    _
  $region9: #{tpu_custom_call.1} parent=0 // pred_fallthru
    _
  // Predicated region
  $region10: #{tpu_custom_call.1} parent=0 // pred_check
    _
  $region11: #{tpu_custom_call.1} parent=0 // pred_check_branch
    %17 = sbr.rel (0) target = $region13
  $region12: #{tpu_custom_call.1} parent=0 // pred_region
    _
  $region13: #{tpu_custom_call.1} parent=0 // pred_fallthru
    _
  // Predicated region
  $region14: #{tpu_custom_call.1} parent=0 // pred_check
    _
  $region15: #{tpu_custom_call.1} parent=0 // pred_check_branch
    %19 = sbr.rel (0) target = $region17
  $region16: #{tpu_custom_call.1} parent=0 // pred_region
    _
  $region17: #{tpu_custom_call.1} parent=0 // pred_fallthru
    _
  // Predicated region
  $region18: #{tpu_custom_call.1} parent=0 // pred_check
    _
  $region19: #{tpu_custom_call.1} parent=0 // pred_check_branch
    %21 = sbr.rel (0) target = $region21
  $region20: #{tpu_custom_call.1} parent=0 // pred_region
    _
  $region21: #{tpu_custom_call.1} parent=0 // pred_fallthru
    _
  // Predicated region
  $region22: #{tpu_custom_call.1} parent=0 // pred_check
    _
  $region23: #{tpu_custom_call.1} parent=0 // pred_check_branch
    %23 = sbr.rel (0) target = $region25
  $region24: #{tpu_custom_call.1} parent=0 // pred_region
    _
  $region25: #{tpu_custom_call.1} parent=0 // pred_fallthru
    _
  // Predicated region
  $region26: #{tpu_custom_call.1} parent=0 // pred_check
    _
  $region27: #{tpu_custom_call.1} parent=0 // pred_check_branch
    %25 = sbr.rel (0) target = $region29
  $region28: #{tpu_custom_call.1} parent=0 // pred_region
    _
  $region29: #{tpu_custom_call.1} parent=0 // pred_fallthru
    _
  %v26 = vld [vmem:[%s0] sm:$0xff]
  %v27 = vld [vmem:[%s1] sm:$0xf]
  %v28 = vld [vmem:[%s2] sm:$0x1]
  %v30 = vlaneseq
  %v31 = vshrl.u32 %v30, 7
  %v32 = vsub.s32 0, %v31
  %v33 = vrot.slane %v28, %v32
  %36 = vset.pattern.permute.xlu0 0
  %37 = vperm.xlu0 %36, %v26
  %v38 = vpop.permute.xlu0 %37
  %v40 = vlaneseq
  %v41 = vshrl.u32 %v40, 7
  %v42 = vsub.s32 0, %v41
  %v43 = vrot.slane %v27, %v42
  %v44 = vmul.f32 %v38, %v43
  %v45 = vadd.f32 %v33, %v44
  %46 = vset.pattern.permute.xlu0 1
  %47 = vperm.xlu0 %46, %v26
  %v48 = vpop.permute.xlu0 %47
  %v50 = vlaneseq
  %v51 = vshrl.u32 %v50, 7
  %v52 = vsub.s32 1, %v51
  %v53 = vrot.slane %v27, %v52
  %v54 = vmul.f32 %v48, %v53
  %v55 = vadd.f32 %v45, %v54
  %56 = vset.pattern.permute.xlu0 2
  %57 = vperm.xlu0 %56, %v26
  %v58 = vpop.permute.xlu0 %57
  %v60 = vlaneseq
  %v61 = vshrl.u32 %v60, 7
  %v62 = vsub.s32 2, %v61
  %v63 = vrot.slane %v27, %v62
  %v64 = vmul.f32 %v58, %v63
  %v65 = vadd.f32 %v55, %v64
  %66 = vset.pattern.permute.xlu0 3
  %67 = vperm.xlu0 %66, %v26
  %v68 = vpop.permute.xlu0 %67
  %v70 = vlaneseq
  %v71 = vshrl.u32 %v70, 7
  %v72 = vsub.s32 3, %v71
  %v73 = vrot.slane %v27, %v72
  %v74 = vmul.f32 %v68, %v73
  %v75 = vadd.f32 %v65, %v74
  %v76 = vtanh.pop %v75
  %v77 = vld [vmem:[%s3] sm:$0xff]
  %v78 = vld [vmem:[%s3 + $0x8] sm:$0xff]
  %v79 = vld [vmem:[%s3 + $0x10] sm:$0xff]
  %v80 = vld [vmem:[%s3 + $0x18] sm:$0xff]
  %v81 = vld [vmem:[%s4] sm:$0x1]
  %v83 = vlaneseq
  %v84 = vshrl.u32 %v83, 7
  %v85 = vsub.s32 0, %v84
  %v86 = vrot.slane %v81, %v85
  %vm88 = vcmask 261120
  %v90 = vsel %vm88, %v76, 0
  %92 = vmatprep.subr.mxu0 0.0
  %93 = vmatpush1.msra.mxu0 %v77
  %94 = vmatprep.subr.mxu0 0.0
  %95 = vmatpush1.msra.mxu0 %v78
  %96 = vmatprep.subr.mxu0 0.0
  %97 = vmatpush1.msra.mxu0 %v79
  %98 = vmatprep.subr.mxu0 0.0
  %99 = vmatpush1.msra.mxu0 %v80
  %100 = vmatprep.subr.mxu0 0.0
  %101 = vmatpush1.msra.mxu0 0.0
  %102 = vmatprep.subr.mxu0 0.0
  %103 = vmatpush1.msra.mxu0 0.0
  %104 = vmatprep.subr.mxu0 0.0
  %105 = vmatpush1.msra.mxu0 0.0
  %106 = vmatprep.subr.mxu0 0.0
  %107 = vmatpush1.msra.mxu0 0.0
  %108 = vmatprep.subr.mxu0 0.0
  %109 = vmatpush1.msra.mxu0 0.0
  %110 = vmatprep.subr.mxu0 0.0
  %111 = vmatpush1.msra.mxu0 0.0
  %112 = vmatprep.subr.mxu0 0.0
  %113 = vmatpush1.msra.mxu0 0.0
  %114 = vmatprep.subr.mxu0 0.0
  %115 = vmatpush1.msra.mxu0 0.0
  %116 = vmatprep.subr.mxu0 0.0
  %117 = vmatpush1.msra.mxu0 0.0
  %118 = vmatprep.subr.mxu0 0.0
  %119 = vmatpush1.msra.mxu0 0.0
  %120 = vmatprep.subr.mxu0 0.0
  %121 = vmatpush1.msra.mxu0 0.0
  %122 = vmatprep.subr.mxu0 0.0
  %123 = vmatpush1.msra.mxu0 0.0
  %124 = vmatprep.subr.mxu0 0.0
  %125 = vmatpush1.msra.mxu0 0.0
  %126 = vmatprep.subr.mxu0 0.0
  %127 = vmatpush1.msra.mxu0 0.0
  %128 = vmatprep.subr.mxu0 0.0
  %129 = vmatpush1.msra.mxu0 0.0
  %130 = vmatprep.subr.mxu0 0.0
  %131 = vmatpush1.msra.mxu0 0.0
  %132 = vmatprep.subr.mxu0 0.0
  %133 = vmatpush1.msra.mxu0 0.0
  %134 = vmatprep.subr.mxu0 0.0
  %135 = vmatpush1.msra.mxu0 0.0
  %136 = vmatprep.subr.mxu0 0.0
  %137 = vmatpush1.msra.mxu0 0.0
  %138 = vmatprep.subr.mxu0 0.0
  %139 = vmatpush1.msra.mxu0 0.0
  %140 = vmatprep.subr.mxu0 0.0
  %141 = vmatpush1.msra.mxu0 0.0
  %142 = vmatprep.subr.mxu0 0.0
  %143 = vmatpush1.msra.mxu0 0.0
  %144 = vmatprep.subr.mxu0 0.0
  %145 = vmatpush1.msra.mxu0 0.0
  %146 = vmatprep.subr.mxu0 0.0
  %147 = vmatpush1.msra.mxu0 0.0
  %148 = vmatprep.subr.mxu0 0.0
  %149 = vmatpush1.msra.mxu0 0.0
  %150 = vmatprep.subr.mxu0 0.0
  %151 = vmatpush1.msra.mxu0 0.0
  %152 = vmatprep.subr.mxu0 0.0
  %153 = vmatpush1.msra.mxu0 0.0
  %154 = vmatprep.subr.mxu0 0.0
  %155 = vmatpush1.msra.mxu0 0.0
  %156 = vmatprep.mubr.f32.mxu0 0.0
  %157 = vmatmul.mubr.f32.gmra.mrb[0].mxu0 %v90
  %v158 = vpop.f32.mrb[0].mxu0
  %v159 = vadd.f32 %v86, %v158
  %v160 = vpop.f32.mrb[0].mxu0
  %161 = vdwg.mxu0
  %v162 = vtanh.pop %v159
  %v163 = vld [vmem:[%s5] sm:$0xff]
  %v164 = vld [vmem:[%s5 + $0x8] sm:$0xff]
  %v165 = vld [vmem:[%s5 + $0x10] sm:$0xff]
  %v166 = vld [vmem:[%s5 + $0x18] sm:$0xff]
  %v167 = vld [vmem:[%s6] sm:$0x1]
  %v169 = vlaneseq
  %v170 = vshrl.u32 %v169, 7
  %v171 = vsub.s32 0, %v170
  %v172 = vrot.slane %v167, %v171
  %v175 = vsel %vm88, %v162, 0
  %177 = vmatprep.subr.mxu0 0.0
  %178 = vmatpush1.msra.mxu0 %v163
  %179 = vmatprep.subr.mxu0 0.0
  %180 = vmatpush1.msra.mxu0 %v164
  %181 = vmatprep.subr.mxu0 0.0
  %182 = vmatpush1.msra.mxu0 %v165
  %183 = vmatprep.subr.mxu0 0.0
  %184 = vmatpush1.msra.mxu0 %v166
  %185 = vmatprep.subr.mxu0 0.0
  %186 = vmatpush1.msra.mxu0 0.0
  %187 = vmatprep.subr.mxu0 0.0
  %188 = vmatpush1.msra.mxu0 0.0
  %189 = vmatprep.subr.mxu0 0.0
  %190 = vmatpush1.msra.mxu0 0.0
  %191 = vmatprep.subr.mxu0 0.0
  %192 = vmatpush1.msra.mxu0 0.0
  %193 = vmatprep.subr.mxu0 0.0
  %194 = vmatpush1.msra.mxu0 0.0
  %195 = vmatprep.subr.mxu0 0.0
  %196 = vmatpush1.msra.mxu0 0.0
  %197 = vmatprep.subr.mxu0 0.0
  %198 = vmatpush1.msra.mxu0 0.0
  %199 = vmatprep.subr.mxu0 0.0
  %200 = vmatpush1.msra.mxu0 0.0
  %201 = vmatprep.subr.mxu0 0.0
  %202 = vmatpush1.msra.mxu0 0.0
  %203 = vmatprep.subr.mxu0 0.0
  %204 = vmatpush1.msra.mxu0 0.0
  %205 = vmatprep.subr.mxu0 0.0
  %206 = vmatpush1.msra.mxu0 0.0
  %207 = vmatprep.subr.mxu0 0.0
  %208 = vmatpush1.msra.mxu0 0.0
  %209 = vmatprep.subr.mxu0 0.0
  %210 = vmatpush1.msra.mxu0 0.0
  %211 = vmatprep.subr.mxu0 0.0
  %212 = vmatpush1.msra.mxu0 0.0
  %213 = vmatprep.subr.mxu0 0.0
  %214 = vmatpush1.msra.mxu0 0.0
  %215 = vmatprep.subr.mxu0 0.0
  %216 = vmatpush1.msra.mxu0 0.0
  %217 = vmatprep.subr.mxu0 0.0
  %218 = vmatpush1.msra.mxu0 0.0
  %219 = vmatprep.subr.mxu0 0.0
  %220 = vmatpush1.msra.mxu0 0.0
  %221 = vmatprep.subr.mxu0 0.0
  %222 = vmatpush1.msra.mxu0 0.0
  %223 = vmatprep.subr.mxu0 0.0
  %224 = vmatpush1.msra.mxu0 0.0
  %225 = vmatprep.subr.mxu0 0.0
  %226 = vmatpush1.msra.mxu0 0.0
  %227 = vmatprep.subr.mxu0 0.0
  %228 = vmatpush1.msra.mxu0 0.0
  %229 = vmatprep.subr.mxu0 0.0
  %230 = vmatpush1.msra.mxu0 0.0
  %231 = vmatprep.subr.mxu0 0.0
  %232 = vmatpush1.msra.mxu0 0.0
  %233 = vmatprep.subr.mxu0 0.0
  %234 = vmatpush1.msra.mxu0 0.0
  %235 = vmatprep.subr.mxu0 0.0
  %236 = vmatpush1.msra.mxu0 0.0
  %237 = vmatprep.subr.mxu0 0.0
  %238 = vmatpush1.msra.mxu0 0.0
  %239 = vmatprep.subr.mxu0 0.0
  %240 = vmatpush1.msra.mxu0 0.0
  %241 = vmatprep.mubr.f32.mxu0 0.0
  %242 = vmatmul.mubr.f32.gmra.mrb[0].mxu0 %v175
  %v243 = vpop.f32.mrb[0].mxu0
  %v244 = vadd.f32 %v172, %v243
  %v245 = vpop.f32.mrb[0].mxu0
  %246 = vdwg.mxu0
  %vm247 = vcmask 31744
  %248 = vst.msk [vmem:[%s7] sm:$0xff] %vm247, %v244
  // Predicated region
  $region30: #{tpu_custom_call.1} parent=0 // pred_check
    _
  $region31: #{tpu_custom_call.1} parent=0 // pred_check_branch
    %250 = sbr.rel (0) target = $region33
  $region32: #{tpu_custom_call.1} parent=0 // pred_region
    _
  $region33: #{tpu_custom_call.1} parent=0 // pred_fallthru
    _
  // Predicated region
  $region34: #{tpu_custom_call.1} parent=0 // pred_check
    _
  $region35: #{tpu_custom_call.1} parent=0 // pred_check_branch
    %252 = sbr.rel (0) target = $region37
  $region36: #{tpu_custom_call.1} parent=0 // pred_region
    _
  $region37: #{tpu_custom_call.1} parent=0 // pred_fallthru
    _

</llo_original>
